<compile_context>
chip_gen: v7x
topology: tpu7x:2x2x1
jax: 0.10.0
libtpu: 0.0.40
codegen_flags: <defaults>
</compile_context>

<pallas_src>
import functools

import jax
import jax.numpy as jnp
from jax.experimental import pallas as pl
from jax.experimental.pallas import tpu as pltpu


def _linear_residual_kernel(x_ref, wt_ref, b_ref, o_ref, *, din, dout):
    # x_ref : (B, Din)    f32 in VMEM
    # wt_ref: (Din, Dout) f32 in VMEM  (weight pre-transposed once at init)
    # b_ref : (1, Dout)   f32 in VMEM
    # o_ref : (B, Dout)   f32 in VMEM
    x = x_ref[...]
    wt = wt_ref[...]

    # Epilogue terms first: bias + residual (x concatenated with a
    # compile-time zeros block so columns Din..Dout-1 receive +0).
    zeros_tail = jnp.zeros((x.shape[0], dout - din), x.dtype)
    acc = b_ref[...] + jnp.concatenate([x, zeros_tail], axis=1)   # (B, Dout)

    # VPU-only contraction: Din unrolled broadcast multiply-adds.
    # (1,5)x(5,10) is far too small to be worth an MXU push + FIFO drain.
    for k in range(din):                       # static unroll, din == 5
        acc = acc + x[:, k:k + 1] * wt[k:k + 1, :]

    # One unmasked full-row store — the only output-path instruction.
    o_ref[...] = acc


def linear_residual(x, wt, b):
    """x: (B, Din) f32, wt: (Din, Dout) f32 (pre-transposed), b: (Dout,) f32."""
    B, Din = x.shape
    Dout = wt.shape[1]
    b2 = b.reshape(1, Dout)                    # metadata-only reshape

    vmem = pltpu.MemorySpace.VMEM
    cost = pl.CostEstimate(
        flops=2 * B * Din * Dout + 2 * B * Dout,
        transcendentals=0,
        bytes_accessed=4 * (x.size + wt.size + b.size + B * Dout),
    )
    # NOTE: at (1,5)->(1,10) the custom-call boundary dominates wall time; the
    # real structural lever is fusing/batching at the call site.  The kernel
    # body itself is now a handful of VALU ops feeding one store.
    return pl.pallas_call(
        functools.partial(_linear_residual_kernel, din=Din, dout=Dout),
        out_shape=jax.ShapeDtypeStruct((B, Dout), x.dtype),
        in_specs=[
            pl.BlockSpec(memory_space=vmem),   # x
            pl.BlockSpec(memory_space=vmem),   # wt (Din, Dout)
            pl.BlockSpec(memory_space=vmem),   # bias
        ],
        out_specs=pl.BlockSpec(memory_space=vmem),
        cost_estimate=cost,
    )(x, wt, b2)


if __name__ == "__main__":
    key = jax.random.PRNGKey(0)
    kx, kw, kb = jax.random.split(key, 3)

    B, DIN, DOUT = 1, 5, 10

    # Deterministic parameter init (PyTorch Linear default: U(-1/sqrt(in), 1/sqrt(in)))
    bound = 1.0 / jnp.sqrt(jnp.float32(DIN))
    w = jax.random.uniform(kw, (DOUT, DIN), jnp.float32, -bound, bound)
    b = jax.random.uniform(kb, (DOUT,), jnp.float32, -bound, bound)
    # One-time init transpose so the contraction dim is the sublane dim in-kernel.
    wt = jnp.asarray(w.T)                      # (DIN, DOUT)

    # Example input consistent with the module: x ~ randn(1, 5)
    x = jax.random.normal(kx, (B, DIN), jnp.float32)

    fwd = jax.jit(linear_residual)
    out = fwd(x, wt, b)
    out = jax.block_until_ready(out)

    # Reference check (pure JAX) for the well-defined part of the forward.
    v1_ref = x @ w.T + b
    ref = v1_ref + jnp.pad(x, ((0, 0), (0, DOUT - DIN)))
    assert out.shape == (B, DOUT)
    assert jnp.allclose(out, ref, atol=1e-5, rtol=1e-5)

    print("KERNEL_OK")
</pallas_src>

<mosaic_0001>
module attributes {stable_mosaic.version = 11 : i64} {
  func.func @_linear_residual_kernel(%arg0: memref<1x5xf32, #tpu.memory_space<vmem>>, %arg1: memref<5x10xf32, #tpu.memory_space<vmem>>, %arg2: memref<1x10xf32, #tpu.memory_space<vmem>>, %arg3: memref<1x10xf32, #tpu.memory_space<vmem>>) attributes {dimension_semantics = [], scalar_prefetch = 0 : i64, scratch_operands = 0 : i64, tpu.core_type = #tpu.core_type<tc>} {
    %c0 = arith.constant 0 : index
    %c0_0 = arith.constant 0 : index
    %0 = vector.load %arg0[%c0, %c0_0] : memref<1x5xf32, #tpu.memory_space<vmem>>, vector<1x5xf32>
    %c0_1 = arith.constant 0 : index
    %c0_2 = arith.constant 0 : index
    %1 = vector.load %arg1[%c0_1, %c0_2] : memref<5x10xf32, #tpu.memory_space<vmem>>, vector<5x10xf32>
    %cst = arith.constant 0.000000e+00 : f32
    %2 = vector.broadcast %cst : f32 to vector<1x5xf32>
    %c0_3 = arith.constant 0 : index
    %c0_4 = arith.constant 0 : index
    %3 = vector.load %arg2[%c0_3, %c0_4] : memref<1x10xf32, #tpu.memory_space<vmem>>, vector<1x10xf32>
    %4 = tpu.concatenate %0, %2 in 1 : vector<1x5xf32>, vector<1x5xf32> -> vector<1x10xf32>
    %5 = arith.addf %3, %4 : vector<1x10xf32>
    %6 = vector.extract_strided_slice %0 {offsets = [0, 0], sizes = [1, 1], strides = [1, 1]} : vector<1x5xf32> to vector<1x1xf32>
    %7 = vector.extract_strided_slice %1 {offsets = [0, 0], sizes = [1, 10], strides = [1, 1]} : vector<5x10xf32> to vector<1x10xf32>
    %8 = vector.broadcast %6 : vector<1x1xf32> to vector<1x10xf32>
    %9 = arith.mulf %8, %7 : vector<1x10xf32>
    %10 = arith.addf %5, %9 : vector<1x10xf32>
    %11 = vector.extract_strided_slice %0 {offsets = [0, 1], sizes = [1, 1], strides = [1, 1]} : vector<1x5xf32> to vector<1x1xf32>
    %12 = vector.extract_strided_slice %1 {offsets = [1, 0], sizes = [1, 10], strides = [1, 1]} : vector<5x10xf32> to vector<1x10xf32>
    %13 = vector.broadcast %11 : vector<1x1xf32> to vector<1x10xf32>
    %14 = arith.mulf %13, %12 : vector<1x10xf32>
    %15 = arith.addf %10, %14 : vector<1x10xf32>
    %16 = vector.extract_strided_slice %0 {offsets = [0, 2], sizes = [1, 1], strides = [1, 1]} : vector<1x5xf32> to vector<1x1xf32>
    %17 = vector.extract_strided_slice %1 {offsets = [2, 0], sizes = [1, 10], strides = [1, 1]} : vector<5x10xf32> to vector<1x10xf32>
    %18 = vector.broadcast %16 : vector<1x1xf32> to vector<1x10xf32>
    %19 = arith.mulf %18, %17 : vector<1x10xf32>
    %20 = arith.addf %15, %19 : vector<1x10xf32>
    %21 = vector.extract_strided_slice %0 {offsets = [0, 3], sizes = [1, 1], strides = [1, 1]} : vector<1x5xf32> to vector<1x1xf32>
    %22 = vector.extract_strided_slice %1 {offsets = [3, 0], sizes = [1, 10], strides = [1, 1]} : vector<5x10xf32> to vector<1x10xf32>
    %23 = vector.broadcast %21 : vector<1x1xf32> to vector<1x10xf32>
    %24 = arith.mulf %23, %22 : vector<1x10xf32>
    %25 = arith.addf %20, %24 : vector<1x10xf32>
    %26 = vector.extract_strided_slice %0 {offsets = [0, 4], sizes = [1, 1], strides = [1, 1]} : vector<1x5xf32> to vector<1x1xf32>
    %27 = vector.extract_strided_slice %1 {offsets = [4, 0], sizes = [1, 10], strides = [1, 1]} : vector<5x10xf32> to vector<1x10xf32>
    %28 = vector.broadcast %26 : vector<1x1xf32> to vector<1x10xf32>
    %29 = arith.mulf %28, %27 : vector<1x10xf32>
    %30 = arith.addf %25, %29 : vector<1x10xf32>
    %c0_5 = arith.constant 0 : index
    %c0_6 = arith.constant 0 : index
    %31 = vector.load %arg3[%c0_5, %c0_6] : memref<1x10xf32, #tpu.memory_space<vmem>>, vector<1x10xf32>
    tpu.vector_store %arg3[%c0_5, %c0_6], %30 {strides = array<i32>} : memref<1x10xf32, #tpu.memory_space<vmem>>, vector<1x10xf32>,
    return
  }
}

</mosaic_0001>

<llo_original>
// kernel: linear_residual.1
$region0: #{linear_residual.1}
  #allocation0 [shape = 'u32[]', space=smem, size = 0x4, offset = 0x4, fixed_abs, tag = 'smem constant byte address 0x4 - core index']
  #allocation1 [shape = 'u32[144,128]{1,0:T(1,128)}', space=vmem, size = 0x12000, scoped, tag = 'internal scratch']
  %s0 = inlined_call_operand.vmem [shape: f32[1,5], index: 0, kind: input, shape index: {}]
  %s1 = inlined_call_operand.hbm [shape: f32[5,10], index: 1, kind: input, shape index: {}]
  %s2 = inlined_call_operand.vmem [shape: f32[1,10], index: 2, kind: input, shape index: {}]
  %s3 = inlined_call_operand.hbm [shape: f32[1,10], index: 3, kind: output, shape index: {}]
  %s4 = sld [smem:[#allocation0]]
  $region26: #{linear_residual.1} parent=0
    _
  %s6 = ssub.s32 1, %s4
  %s7 = scalar_select 0, %s6, %s4
  $region1: #{linear_residual.1} parent=0
    #allocation2 [shape = 'u8[4096]{0}', space=vmem, size = 0x1000, scoped, tag = 'input window, operand 1, single buffered']
    #allocation3 [shape = 's32[1]{0}', space=sflag, size = 0x4, scoped, tag = 'scoped memory for linear_residual.1']
    #allocation4 [shape = 's32[1]{0}', space=sflag, size = 0x4, scoped, tag = 'scoped memory for linear_residual.1']
    #allocation5 [shape = 'u8[512]{0}', space=vmem, size = 0x400, scoped, tag = 'output window, operand 0, single buffered']
    %8 = vsyncpa [#allocation3], 0
    %9 = vsyncpa [#allocation4], 0
    // Predicated region
    $region2: #{linear_residual.1} parent=1 // pred_check
      _
    $region3: #{linear_residual.1} parent=1 // pred_check_branch
      %11 = sbr.rel (0) target = $region5
    $region4: #{linear_residual.1} parent=1 // pred_region
      _
    $region5: #{linear_residual.1} parent=1 // pred_fallthru
      _
    // Predicated region
    $region6: #{linear_residual.1} parent=1 // pred_check
      _
    $region7: #{linear_residual.1} parent=1 // pred_check_branch
      %13 = sbr.rel (0) target = $region9
    $region8: #{linear_residual.1} parent=1 // pred_region
      %s15 = ssub.s32 128, 128
      %16 = vsyncadd [#allocation3], %s15
      %s18 = sshll.u32 [#allocation2], 4
      %s19 = int_to_ptr.vmem [resolvable:$true] %s18
      %21 = dma.hbm_to_vmem [thread:$0]  %s1, 128, %s19, [#allocation3]
    $region9: #{linear_residual.1} parent=1 // pred_fallthru
      _
    // Predicated region
    $region10: #{linear_residual.1} parent=1 // pred_check
      _
    $region11: #{linear_residual.1} parent=1 // pred_check_branch
      %23 = sbr.rel (0) target = $region13
    $region12: #{linear_residual.1} parent=1 // pred_region
      _
    $region13: #{linear_residual.1} parent=1 // pred_fallthru
      _
    // Predicated region
    $region14: #{linear_residual.1} parent=1 // pred_check
      _
    $region15: #{linear_residual.1} parent=1 // pred_check_branch
      %25 = sbr.rel (0) target = $region17
    $region16: #{linear_residual.1} parent=1 // pred_region
      %26 = dma.done [#allocation3], 128
    $region17: #{linear_residual.1} parent=1 // pred_fallthru
      _
    %v27 = vld [vmem:[%s0] sm:$0x1]
    %v28 = vld [vmem:[#allocation2] sm:$0x1f]
    %v29 = vld [vmem:[%s2] sm:$0x1]
    %vm30 = vcmask 39936
    %v31 = vsel %vm30, %v27, 0.0
    %v32 = vadd.f32 %v29, %v31
    %34 = vset.pattern.permute.xlu0 0
    %35 = vperm.xlu0 %34, %v27
    %v36 = vpop.permute.xlu0 %35
    %v38 = vlaneseq
    %v39 = vshrl.u32 %v38, 7
    %v40 = vsub.s32 0, %v39
    %v41 = vrot.slane %v36, %v40
    %v42 = vmul.f32 %v41, %v28
    %v43 = vadd.f32 %v32, %v42
    %44 = vset.pattern.permute.xlu0 1
    %45 = vperm.xlu0 %44, %v27
    %v46 = vpop.permute.xlu0 %45
    %v48 = vlaneseq
    %v49 = vshrl.u32 %v48, 7
    %v50 = vsub.s32 0, %v49
    %v51 = vrot.slane %v46, %v50
    %v52 = vmul.f32 %v51, %v28
    %v55 = vunpack.c.l.s4 1966171168
    %v56 = vunpack.c.0.s8 %v55
    %v57 = vlaneseq
    %v58 = vshrl.u32 %v57, 7
    %v59 = vsub.s32 %v56, %v58
    %v60 = vrot.slane %v52, %v59
    %v61 = vcombine.high %v60, %v60
    %v63 = vunpack.c.l.s4 1966171168
    %v64 = vunpack.c.0.s8 %v63
    %v65 = vlaneseq
    %v66 = vshrl.u32 %v65, 7
    %v67 = vsub.s32 %v64, %v66
    %v68 = vrot.slane %v61, %v67
    %v70 = vadd.f32 %v43, %v68
    %71 = vset.pattern.permute.xlu0 2
    %72 = vperm.xlu0 %71, %v27
    %v73 = vpop.permute.xlu0 %72
    %v75 = vlaneseq
    %v76 = vshrl.u32 %v75, 7
    %v77 = vsub.s32 0, %v76
    %v78 = vrot.slane %v73, %v77
    %v79 = vmul.f32 %v78, %v28
    %v82 = vunpack.c.l.s4 1966171168
    %v83 = vunpack.c.0.s8 %v82
    %v84 = vlaneseq
    %v85 = vshrl.u32 %v84, 7
    %v86 = vsub.s32 %v83, %v85
    %v87 = vrot.slane %v79, %v86
    %v89 = vunpack.c.l.s4 1966171168
    %v90 = vunpack.c.0.s8 %v89
    %v91 = vlaneseq
    %v92 = vshrl.u32 %v91, 7
    %v93 = vsub.s32 %v90, %v92
    %v94 = vrot.slane %v87, %v93
    %v95 = vcombine.high %v94, %v94
    %v97 = vadd.f32 %v70, %v95
    %98 = vset.pattern.permute.xlu0 3
    %99 = vperm.xlu0 %98, %v27
    %v100 = vpop.permute.xlu0 %99
    %v102 = vlaneseq
    %v103 = vshrl.u32 %v102, 7
    %v104 = vsub.s32 0, %v103
    %v105 = vrot.slane %v100, %v104
    %v106 = vmul.f32 %v105, %v28
    %v109 = vunpack.c.l.s4 1966171168
    %v110 = vunpack.c.0.s8 %v109
    %v111 = vlaneseq
    %v112 = vshrl.u32 %v111, 7
    %v113 = vsub.s32 %v110, %v112
    %v114 = vrot.slane %v106, %v113
    %v115 = vcombine.high %v114, %v114
    %v117 = vunpack.c.l.s4 1966171168
    %v118 = vunpack.c.0.s8 %v117
    %v119 = vlaneseq
    %v120 = vshrl.u32 %v119, 7
    %v121 = vsub.s32 %v118, %v120
    %v122 = vrot.slane %v115, %v121
    %v123 = vcombine.high %v122, %v122
    %v125 = vadd.f32 %v97, %v123
    %126 = vset.pattern.permute.xlu0 4
    %127 = vperm.xlu0 %126, %v27
    %v128 = vpop.permute.xlu0 %127
    %v130 = vlaneseq
    %v131 = vshrl.u32 %v130, 7
    %v132 = vsub.s32 0, %v131
    %v133 = vrot.slane %v128, %v132
    %v134 = vmul.f32 %v133, %v28
    %v136 = vcombine.high %v134, %v134
    %v138 = vunpack.c.l.s4 1966171168
    %v139 = vunpack.c.0.s8 %v138
    %v140 = vlaneseq
    %v141 = vshrl.u32 %v140, 7
    %v142 = vsub.s32 %v139, %v141
    %v143 = vrot.slane %v136, %v142
    %v145 = vunpack.c.l.s4 1966171168
    %v146 = vunpack.c.0.s8 %v145
    %v147 = vlaneseq
    %v148 = vshrl.u32 %v147, 7
    %v149 = vsub.s32 %v146, %v148
    %v150 = vrot.slane %v143, %v149
    %v152 = vadd.f32 %v125, %v150
    %vm153 = vcmask 73728
    %154 = vst.msk [vmem:[#allocation5] sm:$0x1] %vm153, %v152
    // Predicated region
    $region18: #{linear_residual.1} parent=1 // pred_check
      _
    $region19: #{linear_residual.1} parent=1 // pred_check_branch
      %156 = sbr.rel (0) target = $region21
    $region20: #{linear_residual.1} parent=1 // pred_region
      %s158 = ssub.s32 16, 16
      %159 = vsyncadd [#allocation4], %s158
      %s161 = sshll.u32 [#allocation5], 4
      %s162 = int_to_ptr.vmem [resolvable:$true] %s161
      %164 = dma.vmem_to_hbm [thread:$0]  %s162, 16, %s3, [#allocation4]
    $region21: #{linear_residual.1} parent=1 // pred_fallthru
      _
    // Predicated region
    $region22: #{linear_residual.1} parent=1 // pred_check
      _
    $region23: #{linear_residual.1} parent=1 // pred_check_branch
      %166 = sbr.rel (0) target = $region25
    $region24: #{linear_residual.1} parent=1 // pred_region
      %167 = dma.done [#allocation4], 16
    $region25: #{linear_residual.1} parent=1 // pred_fallthru
      _
    %168 = vsyncpa [#allocation3], 1
    %169 = vsyncpa [#allocation4], 1

</llo_original>
